<compile_context>
chip_gen: v7x
topology: tpu7x:2x2x1
jax: 0.10.0
libtpu: 0.0.40
codegen_flags: <defaults>
</compile_context>

<pallas_src>
import functools

import jax
import jax.numpy as jnp
from jax.experimental import pallas as pl
from jax.experimental.pallas import tpu as pltpu


def _round_up(n: int, m: int) -> int:
    return ((n + m - 1) // m) * m


def _vmem_limit_bytes() -> int:
    """Generation-aware VMEM cap: ~3/4 of physical, never above 100 MiB."""
    try:
        cap = pltpu.get_tpu_info().vmem_capacity_bytes
    except Exception:
        cap = 64 * 1024 * 1024  # conservative (v7x-sized) fallback
    return min((cap * 3) // 4, 100 * 1024 * 1024)


# --------------------------------------------------------------------------
# Fused kernel: all layers in one body, activations never leave VMEM.
# refs = (x_ref, w0, b0, w1, b1, ..., w_{L-1}, b_{L-1}, o_ref)
# --------------------------------------------------------------------------
def _make_fused_mlp_kernel(n_layers: int):
    def kernel(x_ref, *refs):
        o_ref = refs[-1]
        a = x_ref[...]                                    # f32 activations
        for i in range(n_layers):
            w = refs[2 * i][...]                          # (Din_p, Dout_p) bf16
            b = refs[2 * i + 1][...]                      # (1, Dout_p) f32
            y = jnp.dot(a.astype(jnp.bfloat16), w,
                        preferred_element_type=jnp.float32) + b
            if i + 1 < n_layers:
                a = jnp.maximum(y, 0.0)
            else:
                # Padded class columns already carry logit = -1e30 (folded into
                # the padded bias), so a plain softmax over the padded width is
                # exact over the real classes.
                m = jnp.max(y, axis=1, keepdims=True)
                e = jnp.exp(y - m)
                s = jnp.sum(e, axis=1, keepdims=True)
                inv = pl.reciprocal(s, approx=True)       # EUP slot (free)
                inv = inv * (2.0 - s * inv)               # 1 Newton step → ~f32
                o_ref[...] = e * inv

    return kernel


# --------------------------------------------------------------------------
# One-time parameter preparation (NOT in the per-call path).
# params: list of (w_t, b) with w_t:(Din, Dout), b:(1, Dout), f32.
# Returns tuple of (w_bf16 padded to (Din_p, Dout_p), b_f32 padded to (1, Dout_p)).
# --------------------------------------------------------------------------
def prepare_params(params):
    n_layers = len(params)
    dims = [params[0][0].shape[0]] + [w.shape[1] for w, _ in params]
    dims_p = [_round_up(d, 128) for d in dims]            # lane-dense features

    padded = []
    for i, (w, b) in enumerate(params):
        w_p = (jnp.zeros((dims_p[i], dims_p[i + 1]), jnp.float32)
               .at[: w.shape[0], : w.shape[1]].set(w)).astype(jnp.bfloat16)
        # Fold the padded-class mask into the last layer's bias (finite -1e30,
        # not -inf, to avoid any inf-inf risk).
        fill = -1e30 if i == n_layers - 1 else 0.0
        b_p = (jnp.full((1, dims_p[i + 1]), fill, jnp.float32)
               .at[:, : b.shape[1]].set(b))
        padded.append((w_p, b_p))
    return tuple(padded)


# --------------------------------------------------------------------------
# Forward: pad x, build grid/BlockSpecs, call the fused kernel.
# --------------------------------------------------------------------------
@functools.partial(jax.jit, static_argnames=("n_classes", "block_b"))
def nn_classifier_forward(padded_params, x, n_classes: int, block_b: int = 256):
    B, d_in = x.shape
    n_layers = len(padded_params)
    d_in_p = padded_params[0][0].shape[0]
    d_out_p = padded_params[-1][0].shape[1]

    # Batch tile: multiple of 8 (sublane), capped at block_b.  Small batches
    # collapse to a single grid step.  For large batches on v7x, pick block_b
    # so that b_pad // tb is >= 2 (and even) to feed both TensorCores.
    tb = _round_up(min(block_b, B), 8)
    b_pad = _round_up(B, tb)

    x_p = jnp.zeros((b_pad, d_in_p), jnp.float32).at[:B, :d_in].set(x)

    kernel = _make_fused_mlp_kernel(n_layers)

    in_specs = [pl.BlockSpec((tb, d_in_p), lambda g: (g, 0))]
    flat_params = []
    for w_p, b_p in padded_params:
        # Constant index map → block never changes → single-buffer to halve
        # resident weight VMEM (critical on v7x's 64 MiB per-TC VMEM).
        in_specs.append(pl.BlockSpec(w_p.shape, lambda g: (0, 0),
                                     pipeline_mode=pl.Buffered(1)))
        in_specs.append(pl.BlockSpec(b_p.shape, lambda g: (0, 0),
                                     pipeline_mode=pl.Buffered(1)))
        flat_params += [w_p, b_p]
    out_spec = pl.BlockSpec((tb, d_out_p), lambda g: (g, 0))

    out_p = pl.pallas_call(
        kernel,
        out_shape=jax.ShapeDtypeStruct((b_pad, d_out_p), jnp.float32),
        grid=(b_pad // tb,),
        in_specs=in_specs,
        out_specs=out_spec,
        compiler_params=pltpu.CompilerParams(
            dimension_semantics=("parallel",),        # batch tiles → TCs on v7x
            vmem_limit_bytes=_vmem_limit_bytes(),     # generation-aware cap
        ),
    )(x_p, *flat_params)

    return out_p[:B, :n_classes]


# --------------------------------------------------------------------------
# PyTorch-Linear-style init (weights stored transposed as (in, out)).
# --------------------------------------------------------------------------
def init_params(key, sizes):
    params = []
    for i in range(len(sizes) - 1):
        fan_in, fan_out = sizes[i], sizes[i + 1]
        key, kw, kb = jax.random.split(key, 3)
        bound = 1.0 / jnp.sqrt(fan_in)
        w_t = jax.random.uniform(kw, (fan_in, fan_out), jnp.float32, -bound, bound)
        b = jax.random.uniform(kb, (1, fan_out), jnp.float32, -bound, bound)
        params.append((w_t, b))
    return params


def _reference_forward(params, a, matmul_dtype=jnp.float32):
    """Pure-JAX reference.  matmul_dtype=bf16 mimics the kernel's MXU path."""
    def _mm(a, w):
        return jnp.dot(a.astype(matmul_dtype), w.astype(matmul_dtype),
                       preferred_element_type=jnp.float32)
    for w_t, b in params[:-1]:
        a = jnp.maximum(_mm(a, w_t) + b, 0.0)
    w_t, b = params[-1]
    return jax.nn.softmax(_mm(a, w_t) + b, axis=1)


if __name__ == "__main__":
    sizes = [16, 32, 32, 8]   # input dim, two hidden layers, 8 classes
    batch = 50                # non-multiple of 8 → exercises padding; 1 grid step

    key = jax.random.PRNGKey(0)
    key, kx = jax.random.split(key)
    params = init_params(key, sizes)
    x = jax.random.normal(kx, (batch, sizes[0]), jnp.float32)

    padded_params = prepare_params(params)           # once, outside the hot path

    out = nn_classifier_forward(padded_params, x, n_classes=sizes[-1])
    out = jax.block_until_ready(out)

    assert out.shape == (batch, sizes[-1])

    # Tight check against a reference that uses the same bf16 MXU path.
    ref_bf16 = _reference_forward(params, x, matmul_dtype=jnp.bfloat16)
    assert jnp.allclose(out, ref_bf16, atol=2e-3, rtol=2e-3)

    # Looser check against the exact-f32 PyTorch-equivalent forward
    # (difference is purely the bf16 MXU operands).
    ref_f32 = _reference_forward(params, x, matmul_dtype=jnp.float32)
    assert jnp.allclose(out, ref_f32, atol=3e-2, rtol=3e-2)

    # rows of a softmax sum to ~1 (Newton-refined reciprocal → near-exact)
    assert jnp.allclose(jnp.sum(out, axis=1), jnp.ones((batch,)), atol=1e-3)

    print("KERNEL_OK")
</pallas_src>

<mosaic_0001>
module attributes {stable_mosaic.version = 11 : i64} {
  func.func @kernel(%arg0: i32, %arg1: memref<56x128xf32, #tpu.memory_space<vmem>>, %arg2: memref<128x128xbf16, #tpu.memory_space<vmem>>, %arg3: memref<1x128xf32, #tpu.memory_space<vmem>>, %arg4: memref<128x128xbf16, #tpu.memory_space<vmem>>, %arg5: memref<1x128xf32, #tpu.memory_space<vmem>>, %arg6: memref<128x128xbf16, #tpu.memory_space<vmem>>, %arg7: memref<1x128xf32, #tpu.memory_space<vmem>>, %arg8: memref<56x128xf32, #tpu.memory_space<vmem>>) attributes {dimension_semantics = [#tpu.dimension_semantics<parallel>], iteration_bounds = array<i64: 1>, scalar_prefetch = 0 : i64, scratch_operands = 0 : i64, tpu.core_type = #tpu.core_type<tc>, window_params = [{transform_indices = @transform_0, window_bounds = array<i64: 56, 128>}, {pipeline_mode = #tpu.pipeline_mode<synchronous>, transform_indices = @transform_1, window_bounds = array<i64: 128, 128>}, {pipeline_mode = #tpu.pipeline_mode<synchronous>, transform_indices = @transform_2, window_bounds = array<i64: 1, 128>}, {pipeline_mode = #tpu.pipeline_mode<synchronous>, transform_indices = @transform_3, window_bounds = array<i64: 128, 128>}, {pipeline_mode = #tpu.pipeline_mode<synchronous>, transform_indices = @transform_4, window_bounds = array<i64: 1, 128>}, {pipeline_mode = #tpu.pipeline_mode<synchronous>, transform_indices = @transform_5, window_bounds = array<i64: 128, 128>}, {pipeline_mode = #tpu.pipeline_mode<synchronous>, transform_indices = @transform_6, window_bounds = array<i64: 1, 128>}, {transform_indices = @transform_7, window_bounds = array<i64: 56, 128>}]} {
    %c0 = arith.constant 0 : index
    %c0_0 = arith.constant 0 : index
    %0 = vector.load %arg1[%c0, %c0_0] : memref<56x128xf32, #tpu.memory_space<vmem>>, vector<56x128xf32>
    %c0_1 = arith.constant 0 : index
    %c0_2 = arith.constant 0 : index
    %1 = vector.load %arg2[%c0_1, %c0_2] : memref<128x128xbf16, #tpu.memory_space<vmem>>, vector<128x128xbf16>
    %c0_3 = arith.constant 0 : index
    %c0_4 = arith.constant 0 : index
    %2 = vector.load %arg3[%c0_3, %c0_4] : memref<1x128xf32, #tpu.memory_space<vmem>>, vector<1x128xf32>
    %3 = arith.truncf %0 : vector<56x128xf32> to vector<56x128xbf16>
    %cst = arith.constant dense<0.000000e+00> : vector<56x128xf32>
    %4 = tpu.matmul %3, %1, %cst {dimension_numbers = #tpu.dot_dimension_numbers<[1], [0], [0], [1], [0, 0, 1, 1], [], []>} : vector<56x128xbf16>, vector<128x128xbf16>, vector<56x128xf32> -> vector<56x128xf32>
    %5 = vector.broadcast %2 : vector<1x128xf32> to vector<56x128xf32>
    %6 = arith.addf %4, %5 : vector<56x128xf32>
    %cst_5 = arith.constant 0.000000e+00 : f32
    %7 = vector.broadcast %cst_5 : f32 to vector<56x128xf32>
    %8 = arith.maximumf %6, %7 : vector<56x128xf32>
    %c0_6 = arith.constant 0 : index
    %c0_7 = arith.constant 0 : index
    %9 = vector.load %arg4[%c0_6, %c0_7] : memref<128x128xbf16, #tpu.memory_space<vmem>>, vector<128x128xbf16>
    %c0_8 = arith.constant 0 : index
    %c0_9 = arith.constant 0 : index
    %10 = vector.load %arg5[%c0_8, %c0_9] : memref<1x128xf32, #tpu.memory_space<vmem>>, vector<1x128xf32>
    %11 = arith.truncf %8 : vector<56x128xf32> to vector<56x128xbf16>
    %cst_10 = arith.constant dense<0.000000e+00> : vector<56x128xf32>
    %12 = tpu.matmul %11, %9, %cst_10 {dimension_numbers = #tpu.dot_dimension_numbers<[1], [0], [0], [1], [0, 0, 1, 1], [], []>} : vector<56x128xbf16>, vector<128x128xbf16>, vector<56x128xf32> -> vector<56x128xf32>
    %13 = vector.broadcast %10 : vector<1x128xf32> to vector<56x128xf32>
    %14 = arith.addf %12, %13 : vector<56x128xf32>
    %cst_11 = arith.constant 0.000000e+00 : f32
    %15 = vector.broadcast %cst_11 : f32 to vector<56x128xf32>
    %16 = arith.maximumf %14, %15 : vector<56x128xf32>
    %c0_12 = arith.constant 0 : index
    %c0_13 = arith.constant 0 : index
    %17 = vector.load %arg6[%c0_12, %c0_13] : memref<128x128xbf16, #tpu.memory_space<vmem>>, vector<128x128xbf16>
    %c0_14 = arith.constant 0 : index
    %c0_15 = arith.constant 0 : index
    %18 = vector.load %arg7[%c0_14, %c0_15] : memref<1x128xf32, #tpu.memory_space<vmem>>, vector<1x128xf32>
    %19 = arith.truncf %16 : vector<56x128xf32> to vector<56x128xbf16>
    %cst_16 = arith.constant dense<0.000000e+00> : vector<56x128xf32>
    %20 = tpu.matmul %19, %17, %cst_16 {dimension_numbers = #tpu.dot_dimension_numbers<[1], [0], [0], [1], [0, 0, 1, 1], [], []>} : vector<56x128xbf16>, vector<128x128xbf16>, vector<56x128xf32> -> vector<56x128xf32>
    %21 = vector.broadcast %18 : vector<1x128xf32> to vector<56x128xf32>
    %22 = arith.addf %20, %21 : vector<56x128xf32>
    %cst_17 = arith.constant dense<0xFF800000> : vector<56xf32>
    %23 = vector.multi_reduction <maximumf>, %22, %cst_17 [1] : vector<56x128xf32> to vector<56xf32>
    %24 = vector.shape_cast %23 : vector<56xf32> to vector<56x1xf32>
    %25 = vector.broadcast %24 : vector<56x1xf32> to vector<56x128xf32>
    %26 = arith.subf %22, %25 : vector<56x128xf32>
    %27 = math.exp %26 : vector<56x128xf32>
    %cst_18 = arith.constant dense<0.000000e+00> : vector<56xf32>
    %28 = vector.multi_reduction <add>, %27, %cst_18 [1] : vector<56x128xf32> to vector<56xf32>
    %29 = vector.shape_cast %28 : vector<56xf32> to vector<56x1xf32>
    %30 = tpu.reciprocal %29 {approx = true} : vector<56x1xf32> -> vector<56x1xf32>
    %31 = arith.mulf %29, %30 : vector<56x1xf32>
    %cst_19 = arith.constant 2.000000e+00 : f32
    %32 = vector.broadcast %cst_19 : f32 to vector<56x1xf32>
    %33 = arith.subf %32, %31 : vector<56x1xf32>
    %34 = arith.mulf %30, %33 : vector<56x1xf32>
    %35 = vector.broadcast %34 : vector<56x1xf32> to vector<56x128xf32>
    %36 = arith.mulf %27, %35 : vector<56x128xf32>
    %c0_20 = arith.constant 0 : index
    %c0_21 = arith.constant 0 : index
    %37 = vector.load %arg8[%c0_20, %c0_21] : memref<56x128xf32, #tpu.memory_space<vmem>>, vector<56x128xf32>
    tpu.vector_store %arg8[%c0_20, %c0_21], %36 {strides = array<i32>} : memref<56x128xf32, #tpu.memory_space<vmem>>, vector<56x128xf32>,
    return
  }
  func.func @transform_0(%arg0: i32) -> (i32, i32) {
    %c0_i32 = arith.constant 0 : i32
    %c0_i32_0 = arith.constant 0 : i32
    return %arg0, %c0_i32 : i32, i32
  }
  func.func @transform_1(%arg0: i32) -> (i32, i32) {
    %c0_i32 = arith.constant 0 : i32
    %c0_i32_0 = arith.constant 0 : i32
    %c0_i32_1 = arith.constant 0 : i32
    return %c0_i32, %c0_i32_0 : i32, i32
  }
  func.func @transform_2(%arg0: i32) -> (i32, i32) {
    %c0_i32 = arith.constant 0 : i32
    %c0_i32_0 = arith.constant 0 : i32
    %c0_i32_1 = arith.constant 0 : i32
    return %c0_i32, %c0_i32_0 : i32, i32
  }
  func.func @transform_3(%arg0: i32) -> (i32, i32) {
    %c0_i32 = arith.constant 0 : i32
    %c0_i32_0 = arith.constant 0 : i32
    %c0_i32_1 = arith.constant 0 : i32
    return %c0_i32, %c0_i32_0 : i32, i32
  }
  func.func @transform_4(%arg0: i32) -> (i32, i32) {
    %c0_i32 = arith.constant 0 : i32
    %c0_i32_0 = arith.constant 0 : i32
    %c0_i32_1 = arith.constant 0 : i32
    return %c0_i32, %c0_i32_0 : i32, i32
  }
  func.func @transform_5(%arg0: i32) -> (i32, i32) {
    %c0_i32 = arith.constant 0 : i32
    %c0_i32_0 = arith.constant 0 : i32
    %c0_i32_1 = arith.constant 0 : i32
    return %c0_i32, %c0_i32_0 : i32, i32
  }
  func.func @transform_6(%arg0: i32) -> (i32, i32) {
    %c0_i32 = arith.constant 0 : i32
    %c0_i32_0 = arith.constant 0 : i32
    %c0_i32_1 = arith.constant 0 : i32
    return %c0_i32, %c0_i32_0 : i32, i32
  }
  func.func @transform_7(%arg0: i32) -> (i32, i32) {
    %c0_i32 = arith.constant 0 : i32
    %c0_i32_0 = arith.constant 0 : i32
    return %arg0, %c0_i32 : i32, i32
  }
}

</mosaic_0001>

<llo_original>
// kernel: nn_classifier_forward.1
$region0: #{nn_classifier_forward.1}
  #allocation0 [shape = 'u32[]', space=smem, size = 0x4, offset = 0x4, fixed_abs, tag = 'smem constant byte address 0x4 - core index']
  #allocation1 [shape = 'u32[144,128]{1,0:T(1,128)}', space=vmem, size = 0x12000, scoped, tag = 'internal scratch']
  %s0 = inlined_call_operand.vmem [shape: f32[56,128], index: 0, kind: input, shape index: {}]
  %s1 = inlined_call_operand.vmem [shape: bf16[128,128], index: 1, kind: input, shape index: {}]
  %s2 = inlined_call_operand.hbm [shape: f32[1,128], index: 2, kind: input, shape index: {}]
  %s3 = inlined_call_operand.vmem [shape: bf16[128,128], index: 3, kind: input, shape index: {}]
  %s4 = inlined_call_operand.vmem [shape: f32[1,128], index: 4, kind: input, shape index: {}]
  %s5 = inlined_call_operand.vmem [shape: bf16[128,128], index: 5, kind: input, shape index: {}]
  %s6 = inlined_call_operand.vmem [shape: f32[1,128], index: 6, kind: input, shape index: {}]
  %s7 = inlined_call_operand.vmem [shape: f32[56,128], index: 7, kind: output, shape index: {}]
  %s8 = sld [smem:[#allocation0]]
  $region42: #{nn_classifier_forward.1} parent=0
    _
  %s10 = ssub.s32 1, %s8
  %s11 = scalar_select 0, %s10, %s8
  $region1: #{nn_classifier_forward.1} parent=0
    #allocation2 [shape = 'u8[512]{0}', space=vmem, size = 0x400, scoped, tag = 'input window, operand 2, single buffered']
    #allocation3 [shape = 's32[1]{0}', space=sflag, size = 0x4, scoped, tag = 'scoped memory for nn_classifier_forward.1']
    %12 = vsyncpa [#allocation3], 0
    // Predicated region
    $region2: #{nn_classifier_forward.1} parent=1 // pred_check
      _
    $region3: #{nn_classifier_forward.1} parent=1 // pred_check_branch
      %14 = sbr.rel (0) target = $region5
    $region4: #{nn_classifier_forward.1} parent=1 // pred_region
      _
    $region5: #{nn_classifier_forward.1} parent=1 // pred_fallthru
      _
    // Predicated region
    $region6: #{nn_classifier_forward.1} parent=1 // pred_check
      _
    $region7: #{nn_classifier_forward.1} parent=1 // pred_check_branch
      %16 = sbr.rel (0) target = $region9
    $region8: #{nn_classifier_forward.1} parent=1 // pred_region
      _
    $region9: #{nn_classifier_forward.1} parent=1 // pred_fallthru
      _
    // Predicated region
    $region10: #{nn_classifier_forward.1} parent=1 // pred_check
      _
    $region11: #{nn_classifier_forward.1} parent=1 // pred_check_branch
      %18 = sbr.rel (0) target = $region13
    $region12: #{nn_classifier_forward.1} parent=1 // pred_region
      %s20 = ssub.s32 16, 16
      %21 = vsyncadd [#allocation3], %s20
      %s23 = sshll.u32 [#allocation2], 4
      %s24 = int_to_ptr.vmem [resolvable:$true] %s23
      %26 = dma.hbm_to_vmem [thread:$0]  %s2, 16, %s24, [#allocation3]
    $region13: #{nn_classifier_forward.1} parent=1 // pred_fallthru
      _
    // Predicated region
    $region14: #{nn_classifier_forward.1} parent=1 // pred_check
      _
    $region15: #{nn_classifier_forward.1} parent=1 // pred_check_branch
      %28 = sbr.rel (0) target = $region17
    $region16: #{nn_classifier_forward.1} parent=1 // pred_region
      _
    $region17: #{nn_classifier_forward.1} parent=1 // pred_fallthru
      _
    // Predicated region
    $region18: #{nn_classifier_forward.1} parent=1 // pred_check
      _
    $region19: #{nn_classifier_forward.1} parent=1 // pred_check_branch
      %30 = sbr.rel (0) target = $region21
    $region20: #{nn_classifier_forward.1} parent=1 // pred_region
      _
    $region21: #{nn_classifier_forward.1} parent=1 // pred_fallthru
      _
    // Predicated region
    $region22: #{nn_classifier_forward.1} parent=1 // pred_check
      _
    $region23: #{nn_classifier_forward.1} parent=1 // pred_check_branch
      %32 = sbr.rel (0) target = $region25
    $region24: #{nn_classifier_forward.1} parent=1 // pred_region
      _
    $region25: #{nn_classifier_forward.1} parent=1 // pred_fallthru
      _
    // Predicated region
    $region26: #{nn_classifier_forward.1} parent=1 // pred_check
      _
    $region27: #{nn_classifier_forward.1} parent=1 // pred_check_branch
      %34 = sbr.rel (0) target = $region29
    $region28: #{nn_classifier_forward.1} parent=1 // pred_region
      _
    $region29: #{nn_classifier_forward.1} parent=1 // pred_fallthru
      _
    // Predicated region
    $region30: #{nn_classifier_forward.1} parent=1 // pred_check
      _
    $region31: #{nn_classifier_forward.1} parent=1 // pred_check_branch
      %36 = sbr.rel (0) target = $region33
    $region32: #{nn_classifier_forward.1} parent=1 // pred_region
      %37 = dma.done [#allocation3], 16
    $region33: #{nn_classifier_forward.1} parent=1 // pred_fallthru
      _
    %v39 = vld [vmem:[%s0] sm:$0xff]
    %v40 = vld [vmem:[%s0 + $0x8] sm:$0xff]
    %v41 = vld [vmem:[%s0 + $0x10] sm:$0xff]
    %v42 = vld [vmem:[%s0 + $0x18] sm:$0xff]
    %v43 = vld [vmem:[%s0 + $0x20] sm:$0xff]
    %v44 = vld [vmem:[%s0 + $0x28] sm:$0xff]
    %v45 = vld [vmem:[%s0 + $0x30] sm:$0xff]
    %v46 = vld [vmem:[%s1] sm:$0xf]
    %v47 = vld [vmem:[%s1 + $0x4] sm:$0xf]
    %v48 = vld [vmem:[%s1 + $0x8] sm:$0xf]
    %v49 = vld [vmem:[%s1 + $0xc] sm:$0xf]
    %v50 = vld [vmem:[%s1 + $0x10] sm:$0xf]
    %v51 = vld [vmem:[%s1 + $0x14] sm:$0xf]
    %v52 = vld [vmem:[%s1 + $0x18] sm:$0xf]
    %v53 = vld [vmem:[%s1 + $0x1c] sm:$0xf]
    %v54 = vld [vmem:[%s1 + $0x20] sm:$0xf]
    %v55 = vld [vmem:[%s1 + $0x24] sm:$0xf]
    %v56 = vld [vmem:[%s1 + $0x28] sm:$0xf]
    %v57 = vld [vmem:[%s1 + $0x2c] sm:$0xf]
    %v58 = vld [vmem:[%s1 + $0x30] sm:$0xf]
    %v59 = vld [vmem:[%s1 + $0x34] sm:$0xf]
    %v60 = vld [vmem:[%s1 + $0x38] sm:$0xf]
    %v61 = vld [vmem:[%s1 + $0x3c] sm:$0xf]
    %v62 = vld [vmem:[#allocation2] sm:$0x1]
    %v63 = vpack.c.bf16 %v40, %v39
    %v64 = vpack.c.bf16 %v42, %v41
    %v65 = vpack.c.bf16 %v44, %v43
    %v66 = vpack.c.bf16 %v45, %v45
    %v68 = vlaneseq
    %v69 = vshrl.u32 %v68, 7
    %v70 = vsub.s32 0, %v69
    %v71 = vrot.slane %v62, %v70
    %v89 = vunpack.c.l.b16 %v46
    %v90 = vunpack.c.l.b16 %v47
    %v91 = vunpack.c.l.b16 %v48
    %v92 = vunpack.c.l.b16 %v49
    %v93 = vunpack.c.l.b16 %v50
    %v94 = vunpack.c.l.b16 %v51
    %v95 = vunpack.c.l.b16 %v52
    %v96 = vunpack.c.l.b16 %v53
    %v97 = vunpack.c.l.b16 %v54
    %v98 = vunpack.c.l.b16 %v55
    %v99 = vunpack.c.l.b16 %v56
    %v100 = vunpack.c.l.b16 %v57
    %v101 = vunpack.c.l.b16 %v58
    %v102 = vunpack.c.l.b16 %v59
    %v103 = vunpack.c.l.b16 %v60
    %v104 = vunpack.c.l.b16 %v61
    %v105 = vpack.c.b16 %v90, %v89
    %v106 = vpack.c.b16 %v92, %v91
    %v107 = vpack.c.b16 %v94, %v93
    %v108 = vpack.c.b16 %v96, %v95
    %v109 = vpack.c.b16 %v98, %v97
    %v110 = vpack.c.b16 %v100, %v99
    %v111 = vpack.c.b16 %v102, %v101
    %v112 = vpack.c.b16 %v104, %v103
    %121 = vmatprep.subr.bf16.mxu0 0
    %122 = vmatpush1.bf16.msra.mxu0 %v105
    %123 = vmatprep.subr.bf16.mxu0 0
    %124 = vmatpush1.bf16.msra.mxu0 %v106
    %125 = vmatprep.subr.bf16.mxu0 0
    %126 = vmatpush1.bf16.msra.mxu0 %v107
    %127 = vmatprep.subr.bf16.mxu0 0
    %128 = vmatpush1.bf16.msra.mxu0 %v108
    %129 = vmatprep.subr.bf16.mxu0 0
    %130 = vmatpush1.bf16.msra.mxu0 %v109
    %131 = vmatprep.subr.bf16.mxu0 0
    %132 = vmatpush1.bf16.msra.mxu0 %v110
    %133 = vmatprep.subr.bf16.mxu0 0
    %134 = vmatpush1.bf16.msra.mxu0 %v111
    %135 = vmatprep.subr.bf16.mxu0 0
    %136 = vmatpush1.bf16.msra.mxu0 %v112
    %137 = vmatprep.subr.bf16.mxu0 0
    %138 = vmatpush1.bf16.msra.mxu0 0
    %139 = vmatprep.subr.bf16.mxu0 0
    %140 = vmatpush1.bf16.msra.mxu0 0
    %141 = vmatprep.subr.bf16.mxu0 0
    %142 = vmatpush1.bf16.msra.mxu0 0
    %143 = vmatprep.subr.bf16.mxu0 0
    %144 = vmatpush1.bf16.msra.mxu0 0
    %145 = vmatprep.subr.bf16.mxu0 0
    %146 = vmatpush1.bf16.msra.mxu0 0
    %147 = vmatprep.subr.bf16.mxu0 0
    %148 = vmatpush1.bf16.msra.mxu0 0
    %149 = vmatprep.subr.bf16.mxu0 0
    %150 = vmatpush1.bf16.msra.mxu0 0
    %151 = vmatprep.subr.bf16.mxu0 0
    %152 = vmatpush1.bf16.msra.mxu0 0
    %153 = vmatprep.mubr.bf16.mxu0 0
    %154 = vmatmul.mubr.bf16.gmra.mrb[0].mxu0 %v63
    %v155 = vpop.f32.mrb[0].mxu0
    %v156 = vadd.f32 %v71, %v155
    %v157 = vpop.f32.mrb[0].mxu0
    %v158 = vpop.f32.mrb[0].mxu0
    %v159 = vadd.f32 %v71, %v158
    %v160 = vpop.f32.mrb[0].mxu0
    %161 = vmatprep.mubr.bf16.mxu0 0
    %162 = vmatmul.mubr.bf16.gmra.mrb[0].mxu0 %v64
    %v163 = vpop.f32.mrb[0].mxu0
    %v164 = vadd.f32 %v71, %v163
    %v165 = vpop.f32.mrb[0].mxu0
    %v166 = vpop.f32.mrb[0].mxu0
    %v167 = vadd.f32 %v71, %v166
    %v168 = vpop.f32.mrb[0].mxu0
    %169 = vmatprep.mubr.bf16.mxu0 0
    %170 = vmatmul.mubr.bf16.gmra.mrb[0].mxu0 %v65
    %v171 = vpop.f32.mrb[0].mxu0
    %v172 = vadd.f32 %v71, %v171
    %v173 = vpop.f32.mrb[0].mxu0
    %v174 = vpop.f32.mrb[0].mxu0
    %v175 = vadd.f32 %v71, %v174
    %v176 = vpop.f32.mrb[0].mxu0
    %177 = vmatprep.mubr.bf16.mxu0 0
    %178 = vmatmul.mubr.bf16.gmra.mrb[0].mxu0 %v66
    %v179 = vpop.f32.mrb[0].mxu0
    %v180 = vadd.f32 %v71, %v179
    %v181 = vpop.f32.mrb[0].mxu0
    %v182 = vpop.f32.mrb[0].mxu0
    %v183 = vpop.f32.mrb[0].mxu0
    %184 = vdwg.mxu0
    %v185 = vmax.f32 %v156, 0.0
    %v186 = vmax.f32 %v159, 0.0
    %v187 = vmax.f32 %v164, 0.0
    %v188 = vmax.f32 %v167, 0.0
    %v189 = vmax.f32 %v172, 0.0
    %v190 = vmax.f32 %v175, 0.0
    %v191 = vmax.f32 %v180, 0.0
    %v192 = vld [vmem:[%s3] sm:$0xf]
    %v193 = vld [vmem:[%s3 + $0x4] sm:$0xf]
    %v194 = vld [vmem:[%s3 + $0x8] sm:$0xf]
    %v195 = vld [vmem:[%s3 + $0xc] sm:$0xf]
    %v196 = vld [vmem:[%s3 + $0x10] sm:$0xf]
    %v197 = vld [vmem:[%s3 + $0x14] sm:$0xf]
    %v198 = vld [vmem:[%s3 + $0x18] sm:$0xf]
    %v199 = vld [vmem:[%s3 + $0x1c] sm:$0xf]
    %v200 = vld [vmem:[%s3 + $0x20] sm:$0xf]
    %v201 = vld [vmem:[%s3 + $0x24] sm:$0xf]
    %v202 = vld [vmem:[%s3 + $0x28] sm:$0xf]
    %v203 = vld [vmem:[%s3 + $0x2c] sm:$0xf]
    %v204 = vld [vmem:[%s3 + $0x30] sm:$0xf]
    %v205 = vld [vmem:[%s3 + $0x34] sm:$0xf]
    %v206 = vld [vmem:[%s3 + $0x38] sm:$0xf]
    %v207 = vld [vmem:[%s3 + $0x3c] sm:$0xf]
    %v208 = vld [vmem:[%s4] sm:$0x1]
    %v209 = vpack.c.bf16 %v186, %v185
    %v210 = vpack.c.bf16 %v188, %v187
    %v211 = vpack.c.bf16 %v190, %v189
    %v212 = vpack.c.bf16 %v191, %v191
    %v214 = vlaneseq
    %v215 = vshrl.u32 %v214, 7
    %v216 = vsub.s32 0, %v215
    %v217 = vrot.slane %v208, %v216
    %v235 = vunpack.c.l.b16 %v192
    %v236 = vunpack.c.l.b16 %v193
    %v237 = vunpack.c.l.b16 %v194
    %v238 = vunpack.c.l.b16 %v195
    %v239 = vunpack.c.l.b16 %v196
    %v240 = vunpack.c.l.b16 %v197
    %v241 = vunpack.c.l.b16 %v198
    %v242 = vunpack.c.l.b16 %v199
    %v243 = vunpack.c.l.b16 %v200
    %v244 = vunpack.c.l.b16 %v201
    %v245 = vunpack.c.l.b16 %v202
    %v246 = vunpack.c.l.b16 %v203
    %v247 = vunpack.c.l.b16 %v204
    %v248 = vunpack.c.l.b16 %v205
    %v249 = vunpack.c.l.b16 %v206
    %v250 = vunpack.c.l.b16 %v207
    %v251 = vpack.c.b16 %v236, %v235
    %v252 = vpack.c.b16 %v238, %v237
    %v253 = vpack.c.b16 %v240, %v239
    %v254 = vpack.c.b16 %v242, %v241
    %v255 = vpack.c.b16 %v244, %v243
    %v256 = vpack.c.b16 %v246, %v245
    %v257 = vpack.c.b16 %v248, %v247
    %v258 = vpack.c.b16 %v250, %v249
    %267 = vmatprep.subr.bf16.mxu0 0
    %268 = vmatpush1.bf16.msra.mxu0 %v251
    %269 = vmatprep.subr.bf16.mxu0 0
    %270 = vmatpush1.bf16.msra.mxu0 %v252
    %271 = vmatprep.subr.bf16.mxu0 0
    %272 = vmatpush1.bf16.msra.mxu0 %v253
    %273 = vmatprep.subr.bf16.mxu0 0
    %274 = vmatpush1.bf16.msra.mxu0 %v254
    %275 = vmatprep.subr.bf16.mxu0 0
    %276 = vmatpush1.bf16.msra.mxu0 %v255
    %277 = vmatprep.subr.bf16.mxu0 0
    %278 = vmatpush1.bf16.msra.mxu0 %v256
    %279 = vmatprep.subr.bf16.mxu0 0
    %280 = vmatpush1.bf16.msra.mxu0 %v257
    %281 = vmatprep.subr.bf16.mxu0 0
    %282 = vmatpush1.bf16.msra.mxu0 %v258
    %283 = vmatprep.subr.bf16.mxu0 0
    %284 = vmatpush1.bf16.msra.mxu0 0
    %285 = vmatprep.subr.bf16.mxu0 0
    %286 = vmatpush1.bf16.msra.mxu0 0
    %287 = vmatprep.subr.bf16.mxu0 0
    %288 = vmatpush1.bf16.msra.mxu0 0
    %289 = vmatprep.subr.bf16.mxu0 0
    %290 = vmatpush1.bf16.msra.mxu0 0
    %291 = vmatprep.subr.bf16.mxu0 0
    %292 = vmatpush1.bf16.msra.mxu0 0
    %293 = vmatprep.subr.bf16.mxu0 0
    %294 = vmatpush1.bf16.msra.mxu0 0
    %295 = vmatprep.subr.bf16.mxu0 0
    %296 = vmatpush1.bf16.msra.mxu0 0
    %297 = vmatprep.subr.bf16.mxu0 0
    %298 = vmatpush1.bf16.msra.mxu0 0
    %299 = vmatprep.mubr.bf16.mxu0 0
    %300 = vmatmul.mubr.bf16.gmra.mrb[0].mxu0 %v209
    %v301 = vpop.f32.mrb[0].mxu0
    %v302 = vadd.f32 %v217, %v301
    %v303 = vpop.f32.mrb[0].mxu0
    %v304 = vpop.f32.mrb[0].mxu0
    %v305 = vadd.f32 %v217, %v304
    %v306 = vpop.f32.mrb[0].mxu0
    %307 = vmatprep.mubr.bf16.mxu0 0
    %308 = vmatmul.mubr.bf16.gmra.mrb[0].mxu0 %v210
    %v309 = vpop.f32.mrb[0].mxu0
    %v310 = vadd.f32 %v217, %v309
    %v311 = vpop.f32.mrb[0].mxu0
    %v312 = vpop.f32.mrb[0].mxu0
    %v313 = vadd.f32 %v217, %v312
    %v314 = vpop.f32.mrb[0].mxu0
    %315 = vmatprep.mubr.bf16.mxu0 0
    %316 = vmatmul.mubr.bf16.gmra.mrb[0].mxu0 %v211
    %v317 = vpop.f32.mrb[0].mxu0
    %v318 = vadd.f32 %v217, %v317
    %v319 = vpop.f32.mrb[0].mxu0
    %v320 = vpop.f32.mrb[0].mxu0
    %v321 = vadd.f32 %v217, %v320
    %v322 = vpop.f32.mrb[0].mxu0
    %323 = vmatprep.mubr.bf16.mxu0 0
    %324 = vmatmul.mubr.bf16.gmra.mrb[0].mxu0 %v212
    %v325 = vpop.f32.mrb[0].mxu0
    %v326 = vadd.f32 %v217, %v325
    %v327 = vpop.f32.mrb[0].mxu0
    %v328 = vpop.f32.mrb[0].mxu0
    %v329 = vpop.f32.mrb[0].mxu0
    %330 = vdwg.mxu0
    %v331 = vmax.f32 %v302, 0.0
    %v332 = vmax.f32 %v305, 0.0
    %v333 = vmax.f32 %v310, 0.0
    %v334 = vmax.f32 %v313, 0.0
    %v335 = vmax.f32 %v318, 0.0
    %v336 = vmax.f32 %v321, 0.0
    %v337 = vmax.f32 %v326, 0.0
    %v338 = vld [vmem:[%s5] sm:$0xf]
    %v339 = vld [vmem:[%s5 + $0x4] sm:$0xf]
    %v340 = vld [vmem:[%s5 + $0x8] sm:$0xf]
    %v341 = vld [vmem:[%s5 + $0xc] sm:$0xf]
    %v342 = vld [vmem:[%s5 + $0x10] sm:$0xf]
    %v343 = vld [vmem:[%s5 + $0x14] sm:$0xf]
    %v344 = vld [vmem:[%s5 + $0x18] sm:$0xf]
    %v345 = vld [vmem:[%s5 + $0x1c] sm:$0xf]
    %v346 = vld [vmem:[%s5 + $0x20] sm:$0xf]
    %v347 = vld [vmem:[%s5 + $0x24] sm:$0xf]
    %v348 = vld [vmem:[%s5 + $0x28] sm:$0xf]
    %v349 = vld [vmem:[%s5 + $0x2c] sm:$0xf]
    %v350 = vld [vmem:[%s5 + $0x30] sm:$0xf]
    %v351 = vld [vmem:[%s5 + $0x34] sm:$0xf]
    %v352 = vld [vmem:[%s5 + $0x38] sm:$0xf]
    %v353 = vld [vmem:[%s5 + $0x3c] sm:$0xf]
    %v354 = vld [vmem:[%s6] sm:$0x1]
    %v355 = vpack.c.bf16 %v332, %v331
    %v356 = vpack.c.bf16 %v334, %v333
    %v357 = vpack.c.bf16 %v336, %v335
    %v358 = vpack.c.bf16 %v337, %v337
    %v360 = vlaneseq
    %v361 = vshrl.u32 %v360, 7
    %v362 = vsub.s32 0, %v361
    %v363 = vrot.slane %v354, %v362
    %v381 = vunpack.c.l.b16 %v338
    %v382 = vunpack.c.l.b16 %v339
    %v383 = vunpack.c.l.b16 %v340
    %v384 = vunpack.c.l.b16 %v341
    %v385 = vunpack.c.l.b16 %v342
    %v386 = vunpack.c.l.b16 %v343
    %v387 = vunpack.c.l.b16 %v344
    %v388 = vunpack.c.l.b16 %v345
    %v389 = vunpack.c.l.b16 %v346
    %v390 = vunpack.c.l.b16 %v347
    %v391 = vunpack.c.l.b16 %v348
    %v392 = vunpack.c.l.b16 %v349
    %v393 = vunpack.c.l.b16 %v350
    %v394 = vunpack.c.l.b16 %v351
    %v395 = vunpack.c.l.b16 %v352
    %v396 = vunpack.c.l.b16 %v353
    %v397 = vpack.c.b16 %v382, %v381
    %v398 = vpack.c.b16 %v384, %v383
    %v399 = vpack.c.b16 %v386, %v385
    %v400 = vpack.c.b16 %v388, %v387
    %v401 = vpack.c.b16 %v390, %v389
    %v402 = vpack.c.b16 %v392, %v391
    %v403 = vpack.c.b16 %v394, %v393
    %v404 = vpack.c.b16 %v396, %v395
    %413 = vmatprep.subr.bf16.mxu0 0
    %414 = vmatpush1.bf16.msra.mxu0 %v397
    %415 = vmatprep.subr.bf16.mxu0 0
    %416 = vmatpush1.bf16.msra.mxu0 %v398
    %417 = vmatprep.subr.bf16.mxu0 0
    %418 = vmatpush1.bf16.msra.mxu0 %v399
    %419 = vmatprep.subr.bf16.mxu0 0
    %420 = vmatpush1.bf16.msra.mxu0 %v400
    %421 = vmatprep.subr.bf16.mxu0 0
    %422 = vmatpush1.bf16.msra.mxu0 %v401
    %423 = vmatprep.subr.bf16.mxu0 0
    %424 = vmatpush1.bf16.msra.mxu0 %v402
    %425 = vmatprep.subr.bf16.mxu0 0
    %426 = vmatpush1.bf16.msra.mxu0 %v403
    %427 = vmatprep.subr.bf16.mxu0 0
    %428 = vmatpush1.bf16.msra.mxu0 %v404
    %429 = vmatprep.subr.bf16.mxu0 0
    %430 = vmatpush1.bf16.msra.mxu0 0
    %431 = vmatprep.subr.bf16.mxu0 0
    %432 = vmatpush1.bf16.msra.mxu0 0
    %433 = vmatprep.subr.bf16.mxu0 0
    %434 = vmatpush1.bf16.msra.mxu0 0
    %435 = vmatprep.subr.bf16.mxu0 0
    %436 = vmatpush1.bf16.msra.mxu0 0
    %437 = vmatprep.subr.bf16.mxu0 0
    %438 = vmatpush1.bf16.msra.mxu0 0
    %439 = vmatprep.subr.bf16.mxu0 0
    %440 = vmatpush1.bf16.msra.mxu0 0
    %441 = vmatprep.subr.bf16.mxu0 0
    %442 = vmatpush1.bf16.msra.mxu0 0
    %443 = vmatprep.subr.bf16.mxu0 0
    %444 = vmatpush1.bf16.msra.mxu0 0
    %445 = vmatprep.mubr.bf16.mxu0 0
    %446 = vmatmul.mubr.bf16.gmra.mrb[0].mxu0 %v355
    %v447 = vpop.f32.mrb[0].mxu0
    %v448 = vadd.f32 %v363, %v447
    %v449 = vpop.f32.mrb[0].mxu0
    %v450 = vpop.f32.mrb[0].mxu0
    %v451 = vadd.f32 %v363, %v450
    %v452 = vpop.f32.mrb[0].mxu0
    %453 = vmatprep.mubr.bf16.mxu0 0
    %454 = vmatmul.mubr.bf16.gmra.mrb[0].mxu0 %v356
    %v455 = vpop.f32.mrb[0].mxu0
    %v456 = vadd.f32 %v363, %v455
    %v457 = vpop.f32.mrb[0].mxu0
    %v458 = vpop.f32.mrb[0].mxu0
    %v459 = vadd.f32 %v363, %v458
    %v460 = vpop.f32.mrb[0].mxu0
    %461 = vmatprep.mubr.bf16.mxu0 0
    %462 = vmatmul.mubr.bf16.gmra.mrb[0].mxu0 %v357
    %v463 = vpop.f32.mrb[0].mxu0
    %v464 = vadd.f32 %v363, %v463
    %v465 = vpop.f32.mrb[0].mxu0
    %v466 = vpop.f32.mrb[0].mxu0
    %v467 = vadd.f32 %v363, %v466
    %v468 = vpop.f32.mrb[0].mxu0
    %469 = vmatprep.mubr.bf16.mxu0 0
    %470 = vmatmul.mubr.bf16.gmra.mrb[0].mxu0 %v358
    %v471 = vpop.f32.mrb[0].mxu0
    %v472 = vadd.f32 %v363, %v471
    %v473 = vpop.f32.mrb[0].mxu0
    %v474 = vpop.f32.mrb[0].mxu0
    %v475 = vpop.f32.mrb[0].mxu0
    %476 = vdwg.mxu0
    %477 = vmax.xlane.f32.xlu0 %v448
    %v478 = vpop.xlane.xlu0 %477
    %479 = vmax.xlane.f32.xlu0 %v451
    %v480 = vpop.xlane.xlu0 %479
    %481 = vmax.xlane.f32.xlu0 %v456
    %v482 = vpop.xlane.xlu0 %481
    %483 = vmax.xlane.f32.xlu0 %v459
    %v484 = vpop.xlane.xlu0 %483
    %485 = vmax.xlane.f32.xlu0 %v464
    %v486 = vpop.xlane.xlu0 %485
    %487 = vmax.xlane.f32.xlu0 %v467
    %v488 = vpop.xlane.xlu0 %487
    %489 = vmax.xlane.f32.xlu0 %v472
    %v490 = vpop.xlane.xlu0 %489
    %v491 = vsub.f32 %v448, %v478
    %v492 = vsub.f32 %v451, %v480
    %v493 = vsub.f32 %v456, %v482
    %v494 = vsub.f32 %v459, %v484
    %v495 = vsub.f32 %v464, %v486
    %v496 = vsub.f32 %v467, %v488
    %v497 = vsub.f32 %v472, %v490
    %v498 = vmul.f32 %v491, 1.442695
    %v499 = vpow.pop %v498
    %v500 = vmul.f32 %v492, 1.442695
    %v501 = vpow.pop %v500
    %v502 = vmul.f32 %v493, 1.442695
    %v503 = vpow.pop %v502
    %v504 = vmul.f32 %v494, 1.442695
    %v505 = vpow.pop %v504
    %v506 = vmul.f32 %v495, 1.442695
    %v507 = vpow.pop %v506
    %v508 = vmul.f32 %v496, 1.442695
    %v509 = vpow.pop %v508
    %v510 = vmul.f32 %v497, 1.442695
    %v511 = vpow.pop %v510
    %512 = vadd.xlane.f32.xlu0 %v499
    %v513 = vpop.xlane.xlu0 %512
    %514 = vadd.xlane.f32.xlu0 %v501
    %v515 = vpop.xlane.xlu0 %514
    %516 = vadd.xlane.f32.xlu0 %v503
    %v517 = vpop.xlane.xlu0 %516
    %518 = vadd.xlane.f32.xlu0 %v505
    %v519 = vpop.xlane.xlu0 %518
    %520 = vadd.xlane.f32.xlu0 %v507
    %v521 = vpop.xlane.xlu0 %520
    %522 = vadd.xlane.f32.xlu0 %v509
    %v523 = vpop.xlane.xlu0 %522
    %524 = vadd.xlane.f32.xlu0 %v511
    %v525 = vpop.xlane.xlu0 %524
    %v526 = vrcp.pop %v513
    %v527 = vrcp.pop %v515
    %v528 = vrcp.pop %v517
    %v529 = vrcp.pop %v519
    %v530 = vrcp.pop %v521
    %v531 = vrcp.pop %v523
    %v532 = vrcp.pop %v525
    %v533 = vmul.f32 %v513, %v526
    %v534 = vmul.f32 %v515, %v527
    %v535 = vmul.f32 %v517, %v528
    %v536 = vmul.f32 %v519, %v529
    %v537 = vmul.f32 %v521, %v530
    %v538 = vmul.f32 %v523, %v531
    %v539 = vmul.f32 %v525, %v532
    %v540 = vsub.f32 2.0, %v533
    %v541 = vsub.f32 2.0, %v534
    %v542 = vsub.f32 2.0, %v535
    %v543 = vsub.f32 2.0, %v536
    %v544 = vsub.f32 2.0, %v537
    %v545 = vsub.f32 2.0, %v538
    %v546 = vsub.f32 2.0, %v539
    %v547 = vmul.f32 %v526, %v540
    %v548 = vmul.f32 %v527, %v541
    %v549 = vmul.f32 %v528, %v542
    %v550 = vmul.f32 %v529, %v543
    %v551 = vmul.f32 %v530, %v544
    %v552 = vmul.f32 %v531, %v545
    %v553 = vmul.f32 %v532, %v546
    %v554 = vmul.f32 %v499, %v547
    %v555 = vmul.f32 %v501, %v548
    %v556 = vmul.f32 %v503, %v549
    %v557 = vmul.f32 %v505, %v550
    %v558 = vmul.f32 %v507, %v551
    %v559 = vmul.f32 %v509, %v552
    %v560 = vmul.f32 %v511, %v553
    %561 = vst [vmem:[%s7] sm:$0xff] %v554
    %562 = vst [vmem:[%s7 + $0x8] sm:$0xff] %v555
    %563 = vst [vmem:[%s7 + $0x10] sm:$0xff] %v556
    %564 = vst [vmem:[%s7 + $0x18] sm:$0xff] %v557
    %565 = vst [vmem:[%s7 + $0x20] sm:$0xff] %v558
    %566 = vst [vmem:[%s7 + $0x28] sm:$0xff] %v559
    %567 = vst [vmem:[%s7 + $0x30] sm:$0xff] %v560
    // Predicated region
    $region34: #{nn_classifier_forward.1} parent=1 // pred_check
      _
    $region35: #{nn_classifier_forward.1} parent=1 // pred_check_branch
      %569 = sbr.rel (0) target = $region37
    $region36: #{nn_classifier_forward.1} parent=1 // pred_region
      _
    $region37: #{nn_classifier_forward.1} parent=1 // pred_fallthru
      _
    // Predicated region
    $region38: #{nn_classifier_forward.1} parent=1 // pred_check
      _
    $region39: #{nn_classifier_forward.1} parent=1 // pred_check_branch
      %571 = sbr.rel (0) target = $region41
    $region40: #{nn_classifier_forward.1} parent=1 // pred_region
      _
    $region41: #{nn_classifier_forward.1} parent=1 // pred_fallthru
      _
    %572 = vsyncpa [#allocation3], 1

</llo_original>
